<compile_context>
chip_gen: v5e
topology: v5e:2x2
jax: 0.10.0
libtpu: 0.0.40
codegen_flags: <defaults>
</compile_context>

<pallas_src>
import functools

import jax
import jax.numpy as jnp
from jax import lax
from jax.experimental import pallas as pl
from jax.experimental.pallas import tpu as pltpu

_LANE = 128
_SUBLANE = 8


def _round_up(n, m):
    return ((n + m - 1) // m) * m


def _cdiv(a, b):
    return (a + b - 1) // b


def _vmem_limits():
    """Returns (tiling budget, hard cap for vmem_limit_bytes), both in bytes."""
    phys = 64 * 1024 * 1024  # conservative default: v7x has the smallest VMEM
    try:
        info = pltpu.get_tpu_info()
        cap = int(getattr(info, "vmem_capacity_bytes", 0) or 0)
        if cap > 0:
            phys = cap
    except Exception:
        pass
    budget = min(int(phys * 0.40), 56 * 1024 * 1024)
    return budget, int(phys * 0.85)


def _dot_nt(a, b_mat):
    # (M, K) x (N, K) -> (M, N): contract last dims so W keeps its native
    # (num_classes, feat_dim) layout; MXU handles the transposed RHS push.
    return lax.dot_general(
        a, b_mat,
        dimension_numbers=(((1,), (1,)), ((), ())),
        preferred_element_type=jnp.float32,
    )


def _linear_kernel_fused(x_ref, w_ref, b_ref, o_ref):
    # Single K step: matmul + bias + lane-dense store, no scratch round trip.
    acc = _dot_nt(x_ref[...], w_ref[...])
    o_ref[...] = (acc + b_ref[...]).astype(o_ref.dtype)


def _linear_kernel_ktiled(x_ref, w_ref, b_ref, o_ref, acc_ref):
    k = pl.program_id(1)

    @pl.when(k == 0)
    def _():
        acc_ref[...] = jnp.zeros_like(acc_ref)

    acc_ref[...] += _dot_nt(x_ref[...], w_ref[...])

    @pl.when(k == pl.num_programs(1) - 1)
    def _():
        o_ref[...] = (acc_ref[...] + b_ref[...]).astype(o_ref.dtype)


@functools.partial(jax.jit, static_argnames=("block_m", "block_k"))
def linear_classifier(x, w, b, *, block_m=None, block_k=None):
    """x: (..., feat_dim), w: (num_classes, feat_dim), b: (num_classes,).

    Returns (..., num_classes) logits, matching nn.Linear(feat_dim, num_classes).
    """
    orig_shape = x.shape
    F = orig_shape[-1]
    C, Fw = w.shape
    assert Fw == F, "weight feature dim must match input feature dim"

    x2 = x.reshape(-1, F)
    B = x2.shape[0]
    out_dtype = x2.dtype
    itemsize = x2.dtype.itemsize

    # Only the tiny operands get touched in the wrapper: lane-pad the class dim
    # of W / bias (c_pad multiple of 128) so output stores are unmasked vst.
    # x is never padded or cast here (no extra HBM pass over the big operand).
    c_pad = _round_up(C, _LANE)
    w_k = w.astype(x2.dtype) if w.dtype != x2.dtype else w
    b_k = b.reshape(1, C).astype(jnp.float32)
    if c_pad != C:
        w_k = jnp.pad(w_k, ((0, c_pad - C), (0, 0)))
        b_k = jnp.pad(b_k, ((0, 0), (0, c_pad - C)))

    budget, vmem_cap = _vmem_limits()

    def working_set(bm, bk, with_acc):
        xs = 2 * bm * bk * itemsize                 # double-buffered x tiles
        ws = 2 * c_pad * bk * itemsize              # W tile (or resident slab)
        outs = 2 * bm * c_pad * out_dtype.itemsize  # double-buffered out tiles
        acc = bm * c_pad * 4 if with_acc else 0     # f32 accumulator scratch
        bias = 2 * c_pad * 4
        return xs + ws + outs + acc + bias

    # ---- batch tiling: ~4 MiB x tiles, even split, ragged grid (no padding) ----
    if block_m is None:
        target_rows = max(
            _SUBLANE, min(2048, (4 * 1024 * 1024) // max(1, F * itemsize)))
        target_rows = _round_up(target_rows, _SUBLANE)
        n_tiles = max(1, _cdiv(B, target_rows))
        if B >= 512:
            n_tiles = max(n_tiles, 2)   # keep both v7x TensorCores busy
        block_m = _round_up(_cdiv(B, n_tiles), _SUBLANE)
        if block_m >= 256:
            block_m = _round_up(block_m, 256)   # match 256x256 MXU (v6e/v7x)
    block_m = max(_SUBLANE, _round_up(block_m, _SUBLANE))

    # ---- reduction tiling: single K step whenever the working set fits VMEM ----
    if block_k is None:
        if working_set(block_m, F, with_acc=False) <= budget:
            block_k = F
        else:
            block_k = _round_up(min(F, 2048), _LANE)
            while block_k > _LANE and working_set(block_m, block_k, True) > budget:
                block_k = _round_up(block_k // 2, _LANE)
            while block_m > _SUBLANE and working_set(block_m, block_k, True) > budget:
                block_m = max(_SUBLANE, _round_up(block_m // 2, _SUBLANE))
    single_step = block_k >= F

    grid_m = _cdiv(B, block_m)
    est = working_set(block_m, min(block_k, F), not single_step)
    vmem_limit = int(min(vmem_cap,
                         max(est + est // 4 + (2 << 20), 32 * 1024 * 1024)))

    cost = pl.CostEstimate(
        flops=2 * B * F * C,
        transcendentals=0,
        bytes_accessed=(x2.size * itemsize
                        + w.size * w.dtype.itemsize
                        + b.size * b.dtype.itemsize
                        + B * C * out_dtype.itemsize),
    )

    if single_step:
        out_padded = pl.pallas_call(
            _linear_kernel_fused,
            out_shape=jax.ShapeDtypeStruct((B, c_pad), out_dtype),
            grid_spec=pltpu.PrefetchScalarGridSpec(
                num_scalar_prefetch=0,
                grid=(grid_m,),
                in_specs=[
                    # x tile over the (ragged) batch axis, full feature width.
                    pl.BlockSpec((block_m, F), lambda i: (i, 0)),
                    # Constant index map: W is DMA'd once and stays resident.
                    pl.BlockSpec((c_pad, F), lambda i: (0, 0)),
                    pl.BlockSpec((1, c_pad), lambda i: (0, 0)),
                ],
                out_specs=pl.BlockSpec((block_m, c_pad), lambda i: (i, 0)),
            ),
            compiler_params=pltpu.CompilerParams(
                dimension_semantics=("parallel",),
                vmem_limit_bytes=vmem_limit,
            ),
            cost_estimate=cost,
        )(x2, w_k, b_k)
    else:
        # K-tiled accumulator path (very large feat_dim only).  The reduction dim
        # must be exactly covered by blocks, so zero-pad F here (one extra HBM
        # pass over x on this rare path; mathematically inert).
        f_pad = _round_up(F, block_k)
        x_p = x2 if f_pad == F else jnp.pad(x2, ((0, 0), (0, f_pad - F)))
        w_p = w_k if f_pad == F else jnp.pad(w_k, ((0, 0), (0, f_pad - F)))
        out_padded = pl.pallas_call(
            _linear_kernel_ktiled,
            out_shape=jax.ShapeDtypeStruct((B, c_pad), out_dtype),
            grid_spec=pltpu.PrefetchScalarGridSpec(
                num_scalar_prefetch=0,
                grid=(grid_m, f_pad // block_k),
                in_specs=[
                    pl.BlockSpec((block_m, block_k), lambda i, k: (i, k)),
                    pl.BlockSpec((c_pad, block_k), lambda i, k: (0, k)),
                    pl.BlockSpec((1, c_pad), lambda i, k: (0, 0)),
                ],
                out_specs=pl.BlockSpec((block_m, c_pad), lambda i, k: (i, 0)),
                scratch_shapes=[pltpu.VMEM((block_m, c_pad), jnp.float32)],
            ),
            compiler_params=pltpu.CompilerParams(
                dimension_semantics=("parallel", "arbitrary"),
                vmem_limit_bytes=vmem_limit,
            ),
            cost_estimate=cost,
        )(x_p, w_p, b_k)

    out = out_padded[:, :C]
    return out.reshape(orig_shape[:-1] + (C,))


if __name__ == "__main__":
    feat_dim = 256
    num_classes = 9
    batch = 8

    key = jax.random.PRNGKey(0)
    kx, kw, kb, kx2 = jax.random.split(key, 4)

    # Deterministic param init mimicking nn.Linear's U(-1/sqrt(fan_in), ...).
    bound = 1.0 / (feat_dim ** 0.5)
    w = jax.random.uniform(kw, (num_classes, feat_dim), jnp.float32, -bound, bound)
    b = jax.random.uniform(kb, (num_classes,), jnp.float32, -bound, bound)
    x = jax.random.normal(kx, (batch, feat_dim), jnp.float32)

    out = jax.block_until_ready(linear_classifier(x, w, b))
    ref = x @ w.T + b
    assert out.shape == (batch, num_classes)
    assert jnp.allclose(out, ref, atol=1e-5, rtol=1e-5), "mismatch vs reference"

    # Ragged batch (not a multiple of the 8-row block) exercises the un-padded grid.
    x_ragged = jax.random.normal(kx2, (13, feat_dim), jnp.float32)
    out_r = jax.block_until_ready(linear_classifier(x_ragged, w, b))
    assert jnp.allclose(out_r, x_ragged @ w.T + b, atol=1e-5, rtol=1e-5), \
        "ragged-batch mismatch"

    # bf16 inputs produced upstream (no wrapper-side cast); looser tolerance.
    out_bf = jax.block_until_ready(
        linear_classifier(x.astype(jnp.bfloat16), w.astype(jnp.bfloat16), b))
    assert jnp.allclose(out_bf.astype(jnp.float32), ref, atol=5e-2, rtol=5e-2), \
        "bf16 path mismatch"

    print("KERNEL_OK")
</pallas_src>

<mosaic_0001>
module attributes {stable_mosaic.version = 11 : i64} {
  func.func @_linear_kernel_fused(%arg0: i32, %arg1: memref<8x256xf32, #tpu.memory_space<vmem>>, %arg2: memref<128x256xf32, #tpu.memory_space<vmem>>, %arg3: memref<1x128xf32, #tpu.memory_space<vmem>>, %arg4: memref<8x128xf32, #tpu.memory_space<vmem>>) attributes {dimension_semantics = [#tpu.dimension_semantics<parallel>], iteration_bounds = array<i64: 1>, scalar_prefetch = 0 : i64, scratch_operands = 0 : i64, tpu.core_type = #tpu.core_type<tc>, window_params = [{transform_indices = @transform_0, window_bounds = array<i64: 8, 256>}, {pipeline_mode = #tpu.pipeline_mode<synchronous>, transform_indices = @transform_1, window_bounds = array<i64: 128, 256>}, {pipeline_mode = #tpu.pipeline_mode<synchronous>, transform_indices = @transform_2, window_bounds = array<i64: 1, 128>}, {transform_indices = @transform_3, window_bounds = array<i64: 8, 128>}]} {
    %c0 = arith.constant 0 : index
    %c0_0 = arith.constant 0 : index
    %0 = vector.load %arg1[%c0, %c0_0] : memref<8x256xf32, #tpu.memory_space<vmem>>, vector<8x256xf32>
    %c0_1 = arith.constant 0 : index
    %c0_2 = arith.constant 0 : index
    %1 = vector.load %arg2[%c0_1, %c0_2] : memref<128x256xf32, #tpu.memory_space<vmem>>, vector<128x256xf32>
    %cst = arith.constant dense<0.000000e+00> : vector<8x128xf32>
    %2 = tpu.matmul %0, %1, %cst {dimension_numbers = #tpu.dot_dimension_numbers<[1], [1], [0], [0], [0, 0, 1, 0], [], []>} : vector<8x256xf32>, vector<128x256xf32>, vector<8x128xf32> -> vector<8x128xf32>
    %c0_3 = arith.constant 0 : index
    %c0_4 = arith.constant 0 : index
    %3 = vector.load %arg3[%c0_3, %c0_4] : memref<1x128xf32, #tpu.memory_space<vmem>>, vector<1x128xf32>
    %4 = vector.broadcast %3 : vector<1x128xf32> to vector<8x128xf32>
    %5 = arith.addf %2, %4 : vector<8x128xf32>
    %c0_5 = arith.constant 0 : index
    %c0_6 = arith.constant 0 : index
    %6 = vector.load %arg4[%c0_5, %c0_6] : memref<8x128xf32, #tpu.memory_space<vmem>>, vector<8x128xf32>
    tpu.vector_store %arg4[%c0_5, %c0_6], %5 {strides = array<i32>} : memref<8x128xf32, #tpu.memory_space<vmem>>, vector<8x128xf32>,
    return
  }
  func.func @transform_0(%arg0: i32) -> (i32, i32) {
    %c0_i32 = arith.constant 0 : i32
    %c0_i32_0 = arith.constant 0 : i32
    return %arg0, %c0_i32 : i32, i32
  }
  func.func @transform_1(%arg0: i32) -> (i32, i32) {
    %c0_i32 = arith.constant 0 : i32
    %c0_i32_0 = arith.constant 0 : i32
    %c0_i32_1 = arith.constant 0 : i32
    return %c0_i32, %c0_i32_0 : i32, i32
  }
  func.func @transform_2(%arg0: i32) -> (i32, i32) {
    %c0_i32 = arith.constant 0 : i32
    %c0_i32_0 = arith.constant 0 : i32
    %c0_i32_1 = arith.constant 0 : i32
    return %c0_i32, %c0_i32_0 : i32, i32
  }
  func.func @transform_3(%arg0: i32) -> (i32, i32) {
    %c0_i32 = arith.constant 0 : i32
    %c0_i32_0 = arith.constant 0 : i32
    return %arg0, %c0_i32 : i32, i32
  }
}

</mosaic_0001>

<llo_original>
// kernel: linear_classifier.1
$region0: #{linear_classifier.1}
  #allocation0 [shape = 'u32[]', space=smem, size = 0x4, offset = 0x4, fixed_abs, tag = 'smem constant byte address 0x4 - core index']
  #allocation1 [shape = 'u32[72,128]{1,0:T(1,128)}', space=vmem, size = 0x9000, scoped, tag = 'internal scratch']
  %s0 = inlined_call_operand.vmem [shape: f32[8,256], index: 0, kind: input, shape index: {}]
  %s1 = inlined_call_operand.vmem [shape: f32[128,256], index: 1, kind: input, shape index: {}]
  %s2 = inlined_call_operand.vmem [shape: f32[1,128], index: 2, kind: input, shape index: {}]
  %s3 = inlined_call_operand.hbm [shape: f32[8,128], index: 3, kind: output, shape index: {}]
  %s4 = sld [smem:[#allocation0]]
  $region22: #{linear_classifier.1} parent=0
    _
  %s6 = ssub.s32 1, %s4
  %s7 = scalar_select 0, %s6, %s4
  $region1: #{linear_classifier.1} parent=0
    #allocation2 [shape = 'u8[4096]{0}', space=vmem, size = 0x1000, scoped, tag = 'output window, operand 0, single buffered']
    #allocation3 [shape = 's32[1]{0}', space=sflag, size = 0x4, scoped, tag = 'scoped memory for linear_classifier.1']
    %8 = vsyncpa [#allocation3], 0
    // Predicated region
    $region2: #{linear_classifier.1} parent=1 // pred_check
      _
    $region3: #{linear_classifier.1} parent=1 // pred_check_branch
      %10 = sbr.rel (0) target = $region5
    $region4: #{linear_classifier.1} parent=1 // pred_region
      _
    $region5: #{linear_classifier.1} parent=1 // pred_fallthru
      _
    // Predicated region
    $region6: #{linear_classifier.1} parent=1 // pred_check
      _
    $region7: #{linear_classifier.1} parent=1 // pred_check_branch
      %12 = sbr.rel (0) target = $region9
    $region8: #{linear_classifier.1} parent=1 // pred_region
      _
    $region9: #{linear_classifier.1} parent=1 // pred_fallthru
      _
    // Predicated region
    $region10: #{linear_classifier.1} parent=1 // pred_check
      _
    $region11: #{linear_classifier.1} parent=1 // pred_check_branch
      %14 = sbr.rel (0) target = $region13
    $region12: #{linear_classifier.1} parent=1 // pred_region
      _
    $region13: #{linear_classifier.1} parent=1 // pred_fallthru
      _
    %v15 = vld [vmem:[%s0] sm:$0xff]
    %v16 = vld [vmem:[%s0 + $0x8] sm:$0xff]
    %v17 = vld [vmem:[%s1] sm:$0xff]
    %v18 = vld [vmem:[%s1 + $0x8] sm:$0xff]
    %v19 = vld [vmem:[%s1 + $0x10] sm:$0xff]
    %v20 = vld [vmem:[%s1 + $0x18] sm:$0xff]
    %v21 = vld [vmem:[%s1 + $0x20] sm:$0xff]
    %v22 = vld [vmem:[%s1 + $0x28] sm:$0xff]
    %v23 = vld [vmem:[%s1 + $0x30] sm:$0xff]
    %v24 = vld [vmem:[%s1 + $0x38] sm:$0xff]
    %v25 = vld [vmem:[%s1 + $0x40] sm:$0xff]
    %v26 = vld [vmem:[%s1 + $0x48] sm:$0xff]
    %v27 = vld [vmem:[%s1 + $0x50] sm:$0xff]
    %v28 = vld [vmem:[%s1 + $0x58] sm:$0xff]
    %v29 = vld [vmem:[%s1 + $0x60] sm:$0xff]
    %v30 = vld [vmem:[%s1 + $0x68] sm:$0xff]
    %v31 = vld [vmem:[%s1 + $0x70] sm:$0xff]
    %v32 = vld [vmem:[%s1 + $0x78] sm:$0xff]
    %v33 = vld [vmem:[%s1 + $0x80] sm:$0xff]
    %v34 = vld [vmem:[%s1 + $0x88] sm:$0xff]
    %v35 = vld [vmem:[%s1 + $0x90] sm:$0xff]
    %v36 = vld [vmem:[%s1 + $0x98] sm:$0xff]
    %v37 = vld [vmem:[%s1 + $0xa0] sm:$0xff]
    %v38 = vld [vmem:[%s1 + $0xa8] sm:$0xff]
    %v39 = vld [vmem:[%s1 + $0xb0] sm:$0xff]
    %v40 = vld [vmem:[%s1 + $0xb8] sm:$0xff]
    %v41 = vld [vmem:[%s1 + $0xc0] sm:$0xff]
    %v42 = vld [vmem:[%s1 + $0xc8] sm:$0xff]
    %v43 = vld [vmem:[%s1 + $0xd0] sm:$0xff]
    %v44 = vld [vmem:[%s1 + $0xd8] sm:$0xff]
    %v45 = vld [vmem:[%s1 + $0xe0] sm:$0xff]
    %v46 = vld [vmem:[%s1 + $0xe8] sm:$0xff]
    %v47 = vld [vmem:[%s1 + $0xf0] sm:$0xff]
    %v48 = vld [vmem:[%s1 + $0xf8] sm:$0xff]
    %v49 = vld [vmem:[%s2] sm:$0x1]
    %v51 = vperm.slane %v49, 0
    %53 = vmatpush.xpose.msra.mxu0 %v47
    %54 = vmatpush.xpose.msra.mxu0 %v45
    %55 = vmatpush.xpose.msra.mxu0 %v43
    %56 = vmatpush.xpose.msra.mxu0 %v41
    %57 = vmatpush.xpose.msra.mxu0 %v39
    %58 = vmatpush.xpose.msra.mxu0 %v37
    %59 = vmatpush.xpose.msra.mxu0 %v35
    %60 = vmatpush.xpose.msra.mxu0 %v33
    %61 = vmatpush.xpose.msra.mxu0 %v31
    %62 = vmatpush.xpose.msra.mxu0 %v29
    %63 = vmatpush.xpose.msra.mxu0 %v27
    %64 = vmatpush.xpose.msra.mxu0 %v25
    %65 = vmatpush.xpose.msra.mxu0 %v23
    %66 = vmatpush.xpose.msra.mxu0 %v21
    %67 = vmatpush.xpose.msra.mxu0 %v19
    %68 = vmatpush.xpose.msra.mxu0 %v17
    %69 = vmatmul.f32.gmra.mxu0 %v15
    %v70 = vpop.f32.mrf.mxu0
    %v71 = vadd.f32 %v51, %v70
    %72 = vdwg.mxu0
    %73 = vmatpush.xpose.msra.mxu0 %v48
    %74 = vmatpush.xpose.msra.mxu0 %v46
    %75 = vmatpush.xpose.msra.mxu0 %v44
    %76 = vmatpush.xpose.msra.mxu0 %v42
    %77 = vmatpush.xpose.msra.mxu0 %v40
    %78 = vmatpush.xpose.msra.mxu0 %v38
    %79 = vmatpush.xpose.msra.mxu0 %v36
    %80 = vmatpush.xpose.msra.mxu0 %v34
    %81 = vmatpush.xpose.msra.mxu0 %v32
    %82 = vmatpush.xpose.msra.mxu0 %v30
    %83 = vmatpush.xpose.msra.mxu0 %v28
    %84 = vmatpush.xpose.msra.mxu0 %v26
    %85 = vmatpush.xpose.msra.mxu0 %v24
    %86 = vmatpush.xpose.msra.mxu0 %v22
    %87 = vmatpush.xpose.msra.mxu0 %v20
    %88 = vmatpush.xpose.msra.mxu0 %v18
    %89 = vmatmul.f32.gmra.mxu0 %v16
    %v90 = vpop.f32.mrf.mxu0
    %v91 = vadd.f32 %v71, %v90
    %92 = vdwg.mxu0
    %93 = vst [vmem:[#allocation2] sm:$0xff] %v91
    // Predicated region
    $region14: #{linear_classifier.1} parent=1 // pred_check
      _
    $region15: #{linear_classifier.1} parent=1 // pred_check_branch
      %95 = sbr.rel (0) target = $region17
    $region16: #{linear_classifier.1} parent=1 // pred_region
      %97 = vsyncadd [#allocation3], 0
      %s99 = sshll.u32 [#allocation2], 4
      %s100 = int_to_ptr.vmem [resolvable:$true] %s99
      %s101 = sshll.u32 %s3, 4
      %s102 = int_to_ptr.hbm [resolvable:$true] %s101
      %104 = dma.vmem_to_hbm [thread:$0]  %s100, 128, %s102, [#allocation3]
    $region17: #{linear_classifier.1} parent=1 // pred_fallthru
      _
    // Predicated region
    $region18: #{linear_classifier.1} parent=1 // pred_check
      _
    $region19: #{linear_classifier.1} parent=1 // pred_check_branch
      %106 = sbr.rel (0) target = $region21
    $region20: #{linear_classifier.1} parent=1 // pred_region
      %108 = dma.done [#allocation3], 128
    $region21: #{linear_classifier.1} parent=1 // pred_fallthru
      _
    %109 = vsyncpa [#allocation3], 1

</llo_original>
